<compile_context>
chip_gen: v7x
topology: tpu7x:2x2x1
jax: 0.10.0
libtpu: 0.0.40
codegen_flags: <defaults>
</compile_context>

<pallas_src>
import jax
import jax.numpy as jnp
from jax.experimental import pallas as pl
from jax.experimental.pallas import tpu as pltpu

N_IN = 3     # fc1 input features
N_HID = 10   # fc1 output features / fc2 input features
LANE = 128   # vreg lane width
SUB = 8      # vreg sublane count (f32)


def _net_kernel(w1_ref, b1_ref, w2_ref, b2_ref, x_ref, o_ref):
    """x_ref: (3, TR, 128) f32 -> o_ref: (TR, 128) f32 (batch on sublanes+lanes)."""
    # Read every scalar parameter once from SMEM, outside the FMA chain.
    w1 = [[w1_ref[j, k] for k in range(N_IN)] for j in range(N_HID)]
    b1 = [b1_ref[j] for j in range(N_HID)]
    w2 = [w2_ref[j] for j in range(N_HID)]
    b2 = b2_ref[0]

    rows = [x_ref[k] for k in range(N_IN)]                 # each (TR, 128), dense vregs

    out = jnp.full(o_ref.shape, b2, dtype=jnp.float32)     # fc2 bias
    for j in range(N_HID):                                 # static unroll: 10 units
        acc = rows[0] * w1[j][0] + b1[j]                   # BN folded into W1'/b1'
        for k in range(1, N_IN):
            acc = acc + rows[k] * w1[j][k]
        h = jnp.maximum(acc, 0.0)                          # ReLU (dropout = identity, eval)
        out = out + h * w2[j]                              # fc2 accumulation (VPU)
    o_ref[...] = out                                       # full-vreg lane-dense store


def net_forward(x, params, tr=2048):
    """x: (B, 3) float32 -> (B, 1) float32 (eval-mode Net forward)."""
    B = x.shape[0]
    w1f, b1f, w2, b2 = params

    # Batch layout: element b -> (row = b // 128, lane = b % 128).
    rows = max(1, pl.cdiv(B, LANE))                        # 128-lane rows needed
    rows_aligned = pl.cdiv(rows, SUB) * SUB                # multiple of 8 sublanes

    # Tile rows: multiple of 8, capped at `tr`, and split so the parallel grid
    # has >= 2 steps whenever there is enough work (v7x megacore).
    tile = max(SUB, min(int(tr), rows_aligned))
    tile = (tile // SUB) * SUB
    if rows_aligned > SUB and rows_aligned <= tile:
        tile = pl.cdiv(rows_aligned // 2, SUB) * SUB
    grid = pl.cdiv(rows_aligned, tile)
    rows_pad = grid * tile
    b_pad = rows_pad * LANE

    # Layout change: (B,3) -> (3, rows_pad, 128).  Pad only when needed.
    xt = jnp.asarray(x, jnp.float32).T                     # (3, B)
    if b_pad != B:
        xt = jnp.pad(xt, ((0, 0), (0, b_pad - B)))
    xt = xt.reshape(N_IN, rows_pad, LANE)

    # Double-buffered in + out blocks, with headroom.
    block_bytes = (N_IN + 1) * tile * LANE * 4
    vmem_bytes = int(min(100 << 20, max(16 << 20, 2 * block_bytes + (4 << 20))))

    smem = pl.BlockSpec(memory_space=pltpu.SMEM)
    out = pl.pallas_call(
        _net_kernel,
        out_shape=jax.ShapeDtypeStruct((rows_pad, LANE), jnp.float32),
        grid=(grid,),
        in_specs=[
            smem,                                                 # W1' folded (10, 3)
            smem,                                                 # b1' folded (10,)
            smem,                                                 # W2         (10,)
            smem,                                                 # b2         (1,)
            pl.BlockSpec((N_IN, tile, LANE), lambda i: (0, i, 0)),  # x laid out (3, R, 128)
        ],
        out_specs=pl.BlockSpec((tile, LANE), lambda i: (i, 0)),
        compiler_params=pltpu.CompilerParams(
            dimension_semantics=("parallel",),
            vmem_limit_bytes=vmem_bytes),
    )(w1f, b1f, w2, b2, xt)

    return out.reshape(-1)[:B].reshape(B, 1)               # (B, 1)


def init_params(key):
    """PyTorch-style deterministic init: Linear uniform +/- 1/sqrt(fan_in)."""
    k1, k2, k3, k4 = jax.random.split(key, 4)
    bound1 = 1.0 / jnp.sqrt(3.0)
    w1 = jax.random.uniform(k1, (N_HID, N_IN), jnp.float32, -bound1, bound1)
    b1 = jax.random.uniform(k2, (N_HID,), jnp.float32, -bound1, bound1)
    bound2 = 1.0 / jnp.sqrt(10.0)
    w2 = jax.random.uniform(k3, (1, N_HID), jnp.float32, -bound2, bound2)
    b2 = jax.random.uniform(k4, (1,), jnp.float32, -bound2, bound2)
    # BatchNorm1d(10) defaults: gamma=1, beta=0, running_mean=0, running_var=1
    gamma = jnp.ones((N_HID,), jnp.float32)
    beta = jnp.zeros((N_HID,), jnp.float32)
    rm = jnp.zeros((N_HID,), jnp.float32)
    rv = jnp.ones((N_HID,), jnp.float32)
    return w1, b1, gamma, beta, rm, rv, w2, b2


def fold_bn_into_fc1(w1, b1, gamma, beta, rm, rv, eps=1e-5):
    """Fold eval-mode BatchNorm1d into the preceding Linear's weight and bias."""
    scale = gamma * jax.lax.rsqrt(rv + eps)                 # (10,)
    w1f = w1 * scale[:, None]                               # (10, 3)
    b1f = (b1 - rm) * scale + beta                          # (10,)
    return w1f, b1f


def _reference(x, raw_params):
    """Plain-JAX eval-mode forward with the ORIGINAL (unfolded) parameters."""
    w1, b1, gamma, beta, rm, rv, w2, b2 = raw_params
    h = x @ w1.T + b1
    h = (h - rm) * jax.lax.rsqrt(rv + 1e-5) * gamma + beta
    h = jnp.maximum(h, 0.0)
    return h @ w2.T + b2


if __name__ == "__main__":
    key = jax.random.PRNGKey(0)
    kx, kx2, kp = jax.random.split(key, 3)

    raw = init_params(kp)
    w1, b1, gamma, beta, rm, rv, w2, b2 = raw
    w1f, b1f = fold_bn_into_fc1(w1, b1, gamma, beta, rm, rv)
    params = (w1f, b1f, w2.reshape(-1), b2)

    # Small-batch check (single grid step, heavy lane padding).
    B = 8
    x = jax.random.normal(kx, (B, 3), jnp.float32)
    out = jax.block_until_ready(net_forward(x, params))
    ref = _reference(x, raw)
    assert out.shape == (B, 1)
    assert jnp.allclose(out, ref, atol=1e-5, rtol=1e-4)

    # Larger-batch check (exercises sublane+lane layout, padding, 2-step parallel grid).
    B2 = 2500
    x2 = jax.random.normal(kx2, (B2, 3), jnp.float32)
    out2 = jax.block_until_ready(net_forward(x2, params))
    ref2 = _reference(x2, raw)
    assert out2.shape == (B2, 1)
    assert jnp.allclose(out2, ref2, atol=1e-5, rtol=1e-4)

    print("KERNEL_OK")
</pallas_src>

<mosaic_0001>
module attributes {stable_mosaic.version = 11 : i64} {
  func.func @_net_kernel(%arg0: i32, %arg1: memref<10x3xf32, #tpu.memory_space<smem>>, %arg2: memref<10xf32, #tpu.memory_space<smem>>, %arg3: memref<10xf32, #tpu.memory_space<smem>>, %arg4: memref<1xf32, #tpu.memory_space<smem>>, %arg5: memref<3x8x128xf32, #tpu.memory_space<vmem>>, %arg6: memref<8x128xf32, #tpu.memory_space<vmem>>) attributes {dimension_semantics = [#tpu.dimension_semantics<parallel>], iteration_bounds = array<i64: 1>, scalar_prefetch = 0 : i64, scratch_operands = 0 : i64, tpu.core_type = #tpu.core_type<tc>, window_params = [{transform_indices = @transform_0, window_bounds = array<i64: 10, 3>}, {transform_indices = @transform_1, window_bounds = array<i64: 10>}, {transform_indices = @transform_2, window_bounds = array<i64: 10>}, {transform_indices = @transform_3, window_bounds = array<i64: 1>}, {transform_indices = @transform_4, window_bounds = array<i64: 3, 8, 128>}, {transform_indices = @transform_5, window_bounds = array<i64: 8, 128>}]} {
    %c0 = arith.constant 0 : index
    %c0_0 = arith.constant 0 : index
    %0 = memref.load %arg1[%c0, %c0_0] : memref<10x3xf32, #tpu.memory_space<smem>>
    %c0_1 = arith.constant 0 : index
    %c1 = arith.constant 1 : index
    %1 = memref.load %arg1[%c0_1, %c1] : memref<10x3xf32, #tpu.memory_space<smem>>
    %c0_2 = arith.constant 0 : index
    %c2 = arith.constant 2 : index
    %2 = memref.load %arg1[%c0_2, %c2] : memref<10x3xf32, #tpu.memory_space<smem>>
    %c1_3 = arith.constant 1 : index
    %c0_4 = arith.constant 0 : index
    %3 = memref.load %arg1[%c1_3, %c0_4] : memref<10x3xf32, #tpu.memory_space<smem>>
    %c1_5 = arith.constant 1 : index
    %c1_6 = arith.constant 1 : index
    %4 = memref.load %arg1[%c1_5, %c1_6] : memref<10x3xf32, #tpu.memory_space<smem>>
    %c1_7 = arith.constant 1 : index
    %c2_8 = arith.constant 2 : index
    %5 = memref.load %arg1[%c1_7, %c2_8] : memref<10x3xf32, #tpu.memory_space<smem>>
    %c2_9 = arith.constant 2 : index
    %c0_10 = arith.constant 0 : index
    %6 = memref.load %arg1[%c2_9, %c0_10] : memref<10x3xf32, #tpu.memory_space<smem>>
    %c2_11 = arith.constant 2 : index
    %c1_12 = arith.constant 1 : index
    %7 = memref.load %arg1[%c2_11, %c1_12] : memref<10x3xf32, #tpu.memory_space<smem>>
    %c2_13 = arith.constant 2 : index
    %c2_14 = arith.constant 2 : index
    %8 = memref.load %arg1[%c2_13, %c2_14] : memref<10x3xf32, #tpu.memory_space<smem>>
    %c3 = arith.constant 3 : index
    %c0_15 = arith.constant 0 : index
    %9 = memref.load %arg1[%c3, %c0_15] : memref<10x3xf32, #tpu.memory_space<smem>>
    %c3_16 = arith.constant 3 : index
    %c1_17 = arith.constant 1 : index
    %10 = memref.load %arg1[%c3_16, %c1_17] : memref<10x3xf32, #tpu.memory_space<smem>>
    %c3_18 = arith.constant 3 : index
    %c2_19 = arith.constant 2 : index
    %11 = memref.load %arg1[%c3_18, %c2_19] : memref<10x3xf32, #tpu.memory_space<smem>>
    %c4 = arith.constant 4 : index
    %c0_20 = arith.constant 0 : index
    %12 = memref.load %arg1[%c4, %c0_20] : memref<10x3xf32, #tpu.memory_space<smem>>
    %c4_21 = arith.constant 4 : index
    %c1_22 = arith.constant 1 : index
    %13 = memref.load %arg1[%c4_21, %c1_22] : memref<10x3xf32, #tpu.memory_space<smem>>
    %c4_23 = arith.constant 4 : index
    %c2_24 = arith.constant 2 : index
    %14 = memref.load %arg1[%c4_23, %c2_24] : memref<10x3xf32, #tpu.memory_space<smem>>
    %c5 = arith.constant 5 : index
    %c0_25 = arith.constant 0 : index
    %15 = memref.load %arg1[%c5, %c0_25] : memref<10x3xf32, #tpu.memory_space<smem>>
    %c5_26 = arith.constant 5 : index
    %c1_27 = arith.constant 1 : index
    %16 = memref.load %arg1[%c5_26, %c1_27] : memref<10x3xf32, #tpu.memory_space<smem>>
    %c5_28 = arith.constant 5 : index
    %c2_29 = arith.constant 2 : index
    %17 = memref.load %arg1[%c5_28, %c2_29] : memref<10x3xf32, #tpu.memory_space<smem>>
    %c6 = arith.constant 6 : index
    %c0_30 = arith.constant 0 : index
    %18 = memref.load %arg1[%c6, %c0_30] : memref<10x3xf32, #tpu.memory_space<smem>>
    %c6_31 = arith.constant 6 : index
    %c1_32 = arith.constant 1 : index
    %19 = memref.load %arg1[%c6_31, %c1_32] : memref<10x3xf32, #tpu.memory_space<smem>>
    %c6_33 = arith.constant 6 : index
    %c2_34 = arith.constant 2 : index
    %20 = memref.load %arg1[%c6_33, %c2_34] : memref<10x3xf32, #tpu.memory_space<smem>>
    %c7 = arith.constant 7 : index
    %c0_35 = arith.constant 0 : index
    %21 = memref.load %arg1[%c7, %c0_35] : memref<10x3xf32, #tpu.memory_space<smem>>
    %c7_36 = arith.constant 7 : index
    %c1_37 = arith.constant 1 : index
    %22 = memref.load %arg1[%c7_36, %c1_37] : memref<10x3xf32, #tpu.memory_space<smem>>
    %c7_38 = arith.constant 7 : index
    %c2_39 = arith.constant 2 : index
    %23 = memref.load %arg1[%c7_38, %c2_39] : memref<10x3xf32, #tpu.memory_space<smem>>
    %c8 = arith.constant 8 : index
    %c0_40 = arith.constant 0 : index
    %24 = memref.load %arg1[%c8, %c0_40] : memref<10x3xf32, #tpu.memory_space<smem>>
    %c8_41 = arith.constant 8 : index
    %c1_42 = arith.constant 1 : index
    %25 = memref.load %arg1[%c8_41, %c1_42] : memref<10x3xf32, #tpu.memory_space<smem>>
    %c8_43 = arith.constant 8 : index
    %c2_44 = arith.constant 2 : index
    %26 = memref.load %arg1[%c8_43, %c2_44] : memref<10x3xf32, #tpu.memory_space<smem>>
    %c9 = arith.constant 9 : index
    %c0_45 = arith.constant 0 : index
    %27 = memref.load %arg1[%c9, %c0_45] : memref<10x3xf32, #tpu.memory_space<smem>>
    %c9_46 = arith.constant 9 : index
    %c1_47 = arith.constant 1 : index
    %28 = memref.load %arg1[%c9_46, %c1_47] : memref<10x3xf32, #tpu.memory_space<smem>>
    %c9_48 = arith.constant 9 : index
    %c2_49 = arith.constant 2 : index
    %29 = memref.load %arg1[%c9_48, %c2_49] : memref<10x3xf32, #tpu.memory_space<smem>>
    %c0_50 = arith.constant 0 : index
    %30 = memref.load %arg2[%c0_50] : memref<10xf32, #tpu.memory_space<smem>>
    %c1_51 = arith.constant 1 : index
    %31 = memref.load %arg2[%c1_51] : memref<10xf32, #tpu.memory_space<smem>>
    %c2_52 = arith.constant 2 : index
    %32 = memref.load %arg2[%c2_52] : memref<10xf32, #tpu.memory_space<smem>>
    %c3_53 = arith.constant 3 : index
    %33 = memref.load %arg2[%c3_53] : memref<10xf32, #tpu.memory_space<smem>>
    %c4_54 = arith.constant 4 : index
    %34 = memref.load %arg2[%c4_54] : memref<10xf32, #tpu.memory_space<smem>>
    %c5_55 = arith.constant 5 : index
    %35 = memref.load %arg2[%c5_55] : memref<10xf32, #tpu.memory_space<smem>>
    %c6_56 = arith.constant 6 : index
    %36 = memref.load %arg2[%c6_56] : memref<10xf32, #tpu.memory_space<smem>>
    %c7_57 = arith.constant 7 : index
    %37 = memref.load %arg2[%c7_57] : memref<10xf32, #tpu.memory_space<smem>>
    %c8_58 = arith.constant 8 : index
    %38 = memref.load %arg2[%c8_58] : memref<10xf32, #tpu.memory_space<smem>>
    %c9_59 = arith.constant 9 : index
    %39 = memref.load %arg2[%c9_59] : memref<10xf32, #tpu.memory_space<smem>>
    %c0_60 = arith.constant 0 : index
    %40 = memref.load %arg3[%c0_60] : memref<10xf32, #tpu.memory_space<smem>>
    %c1_61 = arith.constant 1 : index
    %41 = memref.load %arg3[%c1_61] : memref<10xf32, #tpu.memory_space<smem>>
    %c2_62 = arith.constant 2 : index
    %42 = memref.load %arg3[%c2_62] : memref<10xf32, #tpu.memory_space<smem>>
    %c3_63 = arith.constant 3 : index
    %43 = memref.load %arg3[%c3_63] : memref<10xf32, #tpu.memory_space<smem>>
    %c4_64 = arith.constant 4 : index
    %44 = memref.load %arg3[%c4_64] : memref<10xf32, #tpu.memory_space<smem>>
    %c5_65 = arith.constant 5 : index
    %45 = memref.load %arg3[%c5_65] : memref<10xf32, #tpu.memory_space<smem>>
    %c6_66 = arith.constant 6 : index
    %46 = memref.load %arg3[%c6_66] : memref<10xf32, #tpu.memory_space<smem>>
    %c7_67 = arith.constant 7 : index
    %47 = memref.load %arg3[%c7_67] : memref<10xf32, #tpu.memory_space<smem>>
    %c8_68 = arith.constant 8 : index
    %48 = memref.load %arg3[%c8_68] : memref<10xf32, #tpu.memory_space<smem>>
    %c9_69 = arith.constant 9 : index
    %49 = memref.load %arg3[%c9_69] : memref<10xf32, #tpu.memory_space<smem>>
    %c0_70 = arith.constant 0 : index
    %50 = memref.load %arg4[%c0_70] : memref<1xf32, #tpu.memory_space<smem>>
    %c0_71 = arith.constant 0 : index
    %c0_72 = arith.constant 0 : index
    %c0_73 = arith.constant 0 : index
    %51 = vector.load %arg5[%c0_71, %c0_72, %c0_73] : memref<3x8x128xf32, #tpu.memory_space<vmem>>, vector<1x8x128xf32>
    %52 = vector.shape_cast %51 : vector<1x8x128xf32> to vector<8x128xf32>
    %c1_74 = arith.constant 1 : index
    %c0_75 = arith.constant 0 : index
    %c0_76 = arith.constant 0 : index
    %53 = vector.load %arg5[%c1_74, %c0_75, %c0_76] : memref<3x8x128xf32, #tpu.memory_space<vmem>>, vector<1x8x128xf32>
    %54 = vector.shape_cast %53 : vector<1x8x128xf32> to vector<8x128xf32>
    %c2_77 = arith.constant 2 : index
    %c0_78 = arith.constant 0 : index
    %c0_79 = arith.constant 0 : index
    %55 = vector.load %arg5[%c2_77, %c0_78, %c0_79] : memref<3x8x128xf32, #tpu.memory_space<vmem>>, vector<1x8x128xf32>
    %56 = vector.shape_cast %55 : vector<1x8x128xf32> to vector<8x128xf32>
    %57 = vector.broadcast %50 : f32 to vector<8x128xf32>
    %58 = vector.broadcast %0 : f32 to vector<8x128xf32>
    %59 = arith.mulf %52, %58 : vector<8x128xf32>
    %60 = vector.broadcast %30 : f32 to vector<8x128xf32>
    %61 = arith.addf %59, %60 : vector<8x128xf32>
    %62 = vector.broadcast %1 : f32 to vector<8x128xf32>
    %63 = arith.mulf %54, %62 : vector<8x128xf32>
    %64 = arith.addf %61, %63 : vector<8x128xf32>
    %65 = vector.broadcast %2 : f32 to vector<8x128xf32>
    %66 = arith.mulf %56, %65 : vector<8x128xf32>
    %67 = arith.addf %64, %66 : vector<8x128xf32>
    %cst = arith.constant 0.000000e+00 : f32
    %68 = vector.broadcast %cst : f32 to vector<8x128xf32>
    %69 = arith.maximumf %67, %68 : vector<8x128xf32>
    %70 = vector.broadcast %40 : f32 to vector<8x128xf32>
    %71 = arith.mulf %69, %70 : vector<8x128xf32>
    %72 = arith.addf %57, %71 : vector<8x128xf32>
    %73 = vector.broadcast %3 : f32 to vector<8x128xf32>
    %74 = arith.mulf %52, %73 : vector<8x128xf32>
    %75 = vector.broadcast %31 : f32 to vector<8x128xf32>
    %76 = arith.addf %74, %75 : vector<8x128xf32>
    %77 = vector.broadcast %4 : f32 to vector<8x128xf32>
    %78 = arith.mulf %54, %77 : vector<8x128xf32>
    %79 = arith.addf %76, %78 : vector<8x128xf32>
    %80 = vector.broadcast %5 : f32 to vector<8x128xf32>
    %81 = arith.mulf %56, %80 : vector<8x128xf32>
    %82 = arith.addf %79, %81 : vector<8x128xf32>
    %cst_80 = arith.constant 0.000000e+00 : f32
    %83 = vector.broadcast %cst_80 : f32 to vector<8x128xf32>
    %84 = arith.maximumf %82, %83 : vector<8x128xf32>
    %85 = vector.broadcast %41 : f32 to vector<8x128xf32>
    %86 = arith.mulf %84, %85 : vector<8x128xf32>
    %87 = arith.addf %72, %86 : vector<8x128xf32>
    %88 = vector.broadcast %6 : f32 to vector<8x128xf32>
    %89 = arith.mulf %52, %88 : vector<8x128xf32>
    %90 = vector.broadcast %32 : f32 to vector<8x128xf32>
    %91 = arith.addf %89, %90 : vector<8x128xf32>
    %92 = vector.broadcast %7 : f32 to vector<8x128xf32>
    %93 = arith.mulf %54, %92 : vector<8x128xf32>
    %94 = arith.addf %91, %93 : vector<8x128xf32>
    %95 = vector.broadcast %8 : f32 to vector<8x128xf32>
    %96 = arith.mulf %56, %95 : vector<8x128xf32>
    %97 = arith.addf %94, %96 : vector<8x128xf32>
    %cst_81 = arith.constant 0.000000e+00 : f32
    %98 = vector.broadcast %cst_81 : f32 to vector<8x128xf32>
    %99 = arith.maximumf %97, %98 : vector<8x128xf32>
    %100 = vector.broadcast %42 : f32 to vector<8x128xf32>
    %101 = arith.mulf %99, %100 : vector<8x128xf32>
    %102 = arith.addf %87, %101 : vector<8x128xf32>
    %103 = vector.broadcast %9 : f32 to vector<8x128xf32>
    %104 = arith.mulf %52, %103 : vector<8x128xf32>
    %105 = vector.broadcast %33 : f32 to vector<8x128xf32>
    %106 = arith.addf %104, %105 : vector<8x128xf32>
    %107 = vector.broadcast %10 : f32 to vector<8x128xf32>
    %108 = arith.mulf %54, %107 : vector<8x128xf32>
    %109 = arith.addf %106, %108 : vector<8x128xf32>
    %110 = vector.broadcast %11 : f32 to vector<8x128xf32>
    %111 = arith.mulf %56, %110 : vector<8x128xf32>
    %112 = arith.addf %109, %111 : vector<8x128xf32>
    %cst_82 = arith.constant 0.000000e+00 : f32
    %113 = vector.broadcast %cst_82 : f32 to vector<8x128xf32>
    %114 = arith.maximumf %112, %113 : vector<8x128xf32>
    %115 = vector.broadcast %43 : f32 to vector<8x128xf32>
    %116 = arith.mulf %114, %115 : vector<8x128xf32>
    %117 = arith.addf %102, %116 : vector<8x128xf32>
    %118 = vector.broadcast %12 : f32 to vector<8x128xf32>
    %119 = arith.mulf %52, %118 : vector<8x128xf32>
    %120 = vector.broadcast %34 : f32 to vector<8x128xf32>
    %121 = arith.addf %119, %120 : vector<8x128xf32>
    %122 = vector.broadcast %13 : f32 to vector<8x128xf32>
    %123 = arith.mulf %54, %122 : vector<8x128xf32>
    %124 = arith.addf %121, %123 : vector<8x128xf32>
    %125 = vector.broadcast %14 : f32 to vector<8x128xf32>
    %126 = arith.mulf %56, %125 : vector<8x128xf32>
    %127 = arith.addf %124, %126 : vector<8x128xf32>
    %cst_83 = arith.constant 0.000000e+00 : f32
    %128 = vector.broadcast %cst_83 : f32 to vector<8x128xf32>
    %129 = arith.maximumf %127, %128 : vector<8x128xf32>
    %130 = vector.broadcast %44 : f32 to vector<8x128xf32>
    %131 = arith.mulf %129, %130 : vector<8x128xf32>
    %132 = arith.addf %117, %131 : vector<8x128xf32>
    %133 = vector.broadcast %15 : f32 to vector<8x128xf32>
    %134 = arith.mulf %52, %133 : vector<8x128xf32>
    %135 = vector.broadcast %35 : f32 to vector<8x128xf32>
    %136 = arith.addf %134, %135 : vector<8x128xf32>
    %137 = vector.broadcast %16 : f32 to vector<8x128xf32>
    %138 = arith.mulf %54, %137 : vector<8x128xf32>
    %139 = arith.addf %136, %138 : vector<8x128xf32>
    %140 = vector.broadcast %17 : f32 to vector<8x128xf32>
    %141 = arith.mulf %56, %140 : vector<8x128xf32>
    %142 = arith.addf %139, %141 : vector<8x128xf32>
    %cst_84 = arith.constant 0.000000e+00 : f32
    %143 = vector.broadcast %cst_84 : f32 to vector<8x128xf32>
    %144 = arith.maximumf %142, %143 : vector<8x128xf32>
    %145 = vector.broadcast %45 : f32 to vector<8x128xf32>
    %146 = arith.mulf %144, %145 : vector<8x128xf32>
    %147 = arith.addf %132, %146 : vector<8x128xf32>
    %148 = vector.broadcast %18 : f32 to vector<8x128xf32>
    %149 = arith.mulf %52, %148 : vector<8x128xf32>
    %150 = vector.broadcast %36 : f32 to vector<8x128xf32>
    %151 = arith.addf %149, %150 : vector<8x128xf32>
    %152 = vector.broadcast %19 : f32 to vector<8x128xf32>
    %153 = arith.mulf %54, %152 : vector<8x128xf32>
    %154 = arith.addf %151, %153 : vector<8x128xf32>
    %155 = vector.broadcast %20 : f32 to vector<8x128xf32>
    %156 = arith.mulf %56, %155 : vector<8x128xf32>
    %157 = arith.addf %154, %156 : vector<8x128xf32>
    %cst_85 = arith.constant 0.000000e+00 : f32
    %158 = vector.broadcast %cst_85 : f32 to vector<8x128xf32>
    %159 = arith.maximumf %157, %158 : vector<8x128xf32>
    %160 = vector.broadcast %46 : f32 to vector<8x128xf32>
    %161 = arith.mulf %159, %160 : vector<8x128xf32>
    %162 = arith.addf %147, %161 : vector<8x128xf32>
    %163 = vector.broadcast %21 : f32 to vector<8x128xf32>
    %164 = arith.mulf %52, %163 : vector<8x128xf32>
    %165 = vector.broadcast %37 : f32 to vector<8x128xf32>
    %166 = arith.addf %164, %165 : vector<8x128xf32>
    %167 = vector.broadcast %22 : f32 to vector<8x128xf32>
    %168 = arith.mulf %54, %167 : vector<8x128xf32>
    %169 = arith.addf %166, %168 : vector<8x128xf32>
    %170 = vector.broadcast %23 : f32 to vector<8x128xf32>
    %171 = arith.mulf %56, %170 : vector<8x128xf32>
    %172 = arith.addf %169, %171 : vector<8x128xf32>
    %cst_86 = arith.constant 0.000000e+00 : f32
    %173 = vector.broadcast %cst_86 : f32 to vector<8x128xf32>
    %174 = arith.maximumf %172, %173 : vector<8x128xf32>
    %175 = vector.broadcast %47 : f32 to vector<8x128xf32>
    %176 = arith.mulf %174, %175 : vector<8x128xf32>
    %177 = arith.addf %162, %176 : vector<8x128xf32>
    %178 = vector.broadcast %24 : f32 to vector<8x128xf32>
    %179 = arith.mulf %52, %178 : vector<8x128xf32>
    %180 = vector.broadcast %38 : f32 to vector<8x128xf32>
    %181 = arith.addf %179, %180 : vector<8x128xf32>
    %182 = vector.broadcast %25 : f32 to vector<8x128xf32>
    %183 = arith.mulf %54, %182 : vector<8x128xf32>
    %184 = arith.addf %181, %183 : vector<8x128xf32>
    %185 = vector.broadcast %26 : f32 to vector<8x128xf32>
    %186 = arith.mulf %56, %185 : vector<8x128xf32>
    %187 = arith.addf %184, %186 : vector<8x128xf32>
    %cst_87 = arith.constant 0.000000e+00 : f32
    %188 = vector.broadcast %cst_87 : f32 to vector<8x128xf32>
    %189 = arith.maximumf %187, %188 : vector<8x128xf32>
    %190 = vector.broadcast %48 : f32 to vector<8x128xf32>
    %191 = arith.mulf %189, %190 : vector<8x128xf32>
    %192 = arith.addf %177, %191 : vector<8x128xf32>
    %193 = vector.broadcast %27 : f32 to vector<8x128xf32>
    %194 = arith.mulf %52, %193 : vector<8x128xf32>
    %195 = vector.broadcast %39 : f32 to vector<8x128xf32>
    %196 = arith.addf %194, %195 : vector<8x128xf32>
    %197 = vector.broadcast %28 : f32 to vector<8x128xf32>
    %198 = arith.mulf %54, %197 : vector<8x128xf32>
    %199 = arith.addf %196, %198 : vector<8x128xf32>
    %200 = vector.broadcast %29 : f32 to vector<8x128xf32>
    %201 = arith.mulf %56, %200 : vector<8x128xf32>
    %202 = arith.addf %199, %201 : vector<8x128xf32>
    %cst_88 = arith.constant 0.000000e+00 : f32
    %203 = vector.broadcast %cst_88 : f32 to vector<8x128xf32>
    %204 = arith.maximumf %202, %203 : vector<8x128xf32>
    %205 = vector.broadcast %49 : f32 to vector<8x128xf32>
    %206 = arith.mulf %204, %205 : vector<8x128xf32>
    %207 = arith.addf %192, %206 : vector<8x128xf32>
    %c0_89 = arith.constant 0 : index
    %c0_90 = arith.constant 0 : index
    %208 = vector.load %arg6[%c0_89, %c0_90] : memref<8x128xf32, #tpu.memory_space<vmem>>, vector<8x128xf32>
    tpu.vector_store %arg6[%c0_89, %c0_90], %207 {strides = array<i32>} : memref<8x128xf32, #tpu.memory_space<vmem>>, vector<8x128xf32>,
    return
  }
  func.func @transform_0(%arg0: i32) -> (i32, i32) {
    %c0_i32 = arith.constant 0 : i32
    %c0_i32_0 = arith.constant 0 : i32
    %c0_i32_1 = arith.constant 0 : i32
    return %c0_i32, %c0_i32_0 : i32, i32
  }
  func.func @transform_1(%arg0: i32) -> i32 {
    %c0_i32 = arith.constant 0 : i32
    %c0_i32_0 = arith.constant 0 : i32
    return %c0_i32 : i32
  }
  func.func @transform_2(%arg0: i32) -> i32 {
    %c0_i32 = arith.constant 0 : i32
    %c0_i32_0 = arith.constant 0 : i32
    return %c0_i32 : i32
  }
  func.func @transform_3(%arg0: i32) -> i32 {
    %c0_i32 = arith.constant 0 : i32
    %c0_i32_0 = arith.constant 0 : i32
    return %c0_i32 : i32
  }
  func.func @transform_4(%arg0: i32) -> (i32, i32, i32) {
    %c0_i32 = arith.constant 0 : i32
    %c0_i32_0 = arith.constant 0 : i32
    %c0_i32_1 = arith.constant 0 : i32
    return %c0_i32, %arg0, %c0_i32_0 : i32, i32, i32
  }
  func.func @transform_5(%arg0: i32) -> (i32, i32) {
    %c0_i32 = arith.constant 0 : i32
    %c0_i32_0 = arith.constant 0 : i32
    return %arg0, %c0_i32 : i32, i32
  }
}

</mosaic_0001>

<llo_original>
// kernel: tpu_custom_call.1
$region0: #{tpu_custom_call.1}
  #allocation0 [shape = 'u32[]', space=smem, size = 0x4, offset = 0x4, fixed_abs, tag = 'smem constant byte address 0x4 - core index']
  #allocation1 [shape = 'u32[144,128]{1,0:T(1,128)}', space=vmem, size = 0x12000, scoped, tag = 'internal scratch']
  #allocation2 [shape = 'f32[1]{0:T(128)S(6)}', space=smem, size = 0x200, scoped, tag = 'scoped memory for tpu_custom_call.1']
  %s0 = inlined_call_operand.vmem [shape: f32[10,3], index: 0, kind: input, shape index: {}]
  %s1 = inlined_call_operand.vmem [shape: f32[10], index: 1, kind: input, shape index: {}]
  %s2 = inlined_call_operand.vmem [shape: f32[10], index: 2, kind: input, shape index: {}]
  %s3 = inlined_call_operand.<no memory space> [shape: f32[1], index: 3, kind: input, shape index: {}]
  %s4 = inlined_call_operand.vmem [shape: f32[3,8,128], index: 4, kind: input, shape index: {}]
  %s5 = inlined_call_operand.hbm [shape: f32[8,128], index: 5, kind: output, shape index: {}]
  %s6 = sld [smem:[#allocation0]]
  $region42: #{tpu_custom_call.1} parent=0
    _
  %s8 = ssub.s32 1, %s6
  %s9 = scalar_select 0, %s8, %s6
  %10 = sst [smem:[#allocation2]] %s3
  $region1: #{tpu_custom_call.1} parent=0
    #allocation3 [shape = 'u8[8192]{0}', space=smem, size = 0x2000, scoped, tag = 'input window, operand 0, single buffered']
    #allocation4 [shape = 's32[1]{0}', space=sflag, size = 0x4, scoped, tag = 'scoped memory for tpu_custom_call.1']
    #allocation5 [shape = 's32[1]{0}', space=sflag, size = 0x4, scoped, tag = 'scoped memory for tpu_custom_call.1']
    #allocation6 [shape = 'u8[512]{0}', space=smem, size = 0x200, scoped, tag = 'input window, operand 1, single buffered']
    #allocation7 [shape = 's32[1]{0}', space=sflag, size = 0x4, scoped, tag = 'scoped memory for tpu_custom_call.1']
    #allocation8 [shape = 'u8[512]{0}', space=smem, size = 0x200, scoped, tag = 'input window, operand 2, single buffered']
    #allocation9 [shape = 'u8[4096]{0}', space=vmem, size = 0x1000, scoped, tag = 'output window, operand 0, single buffered']
    %11 = vsyncpa [#allocation5], 0
    %12 = vsyncpa [#allocation7], 0
    %13 = vsyncpa [#allocation4], 0
    // Predicated region
    $region2: #{tpu_custom_call.1} parent=1 // pred_check
      _
    $region3: #{tpu_custom_call.1} parent=1 // pred_check_branch
      %15 = sbr.rel (0) target = $region5
    $region4: #{tpu_custom_call.1} parent=1 // pred_region
      %s17 = ssub.s32 256, 256
      %18 = vsyncadd [#allocation5], %s17
      %s19 = sshll.u32 %s0, 4
      %s20 = int_to_ptr.vmem [resolvable:$true] %s19
      %25 = dma.vmem_to_smem %s20, 256, [#allocation3], [#allocation5], 128, 128, 8
    $region5: #{tpu_custom_call.1} parent=1 // pred_fallthru
      _
    // Predicated region
    $region6: #{tpu_custom_call.1} parent=1 // pred_check
      _
    $region7: #{tpu_custom_call.1} parent=1 // pred_check_branch
      %27 = sbr.rel (0) target = $region9
    $region8: #{tpu_custom_call.1} parent=1 // pred_region
      %s29 = ssub.s32 16, 16
      %30 = vsyncadd [#allocation7], %s29
      %s32 = sshll.u32 %s1, 4
      %s33 = int_to_ptr.vmem [resolvable:$true] %s32
      %35 = dma.vmem_to_smem %s33, 16, [#allocation6], [#allocation7]
    $region9: #{tpu_custom_call.1} parent=1 // pred_fallthru
      _
    // Predicated region
    $region10: #{tpu_custom_call.1} parent=1 // pred_check
      _
    $region11: #{tpu_custom_call.1} parent=1 // pred_check_branch
      %37 = sbr.rel (0) target = $region13
    $region12: #{tpu_custom_call.1} parent=1 // pred_region
      %s39 = ssub.s32 16, 16
      %40 = vsyncadd [#allocation7], %s39
      %s42 = sshll.u32 %s2, 4
      %s43 = int_to_ptr.vmem [resolvable:$true] %s42
      %45 = dma.vmem_to_smem %s43, 16, [#allocation8], [#allocation7]
    $region13: #{tpu_custom_call.1} parent=1 // pred_fallthru
      _
    // Predicated region
    $region14: #{tpu_custom_call.1} parent=1 // pred_check
      _
    $region15: #{tpu_custom_call.1} parent=1 // pred_check_branch
      %47 = sbr.rel (0) target = $region17
    $region16: #{tpu_custom_call.1} parent=1 // pred_region
      _
    $region17: #{tpu_custom_call.1} parent=1 // pred_fallthru
      _
    // Predicated region
    $region18: #{tpu_custom_call.1} parent=1 // pred_check
      _
    $region19: #{tpu_custom_call.1} parent=1 // pred_check_branch
      %49 = sbr.rel (0) target = $region21
    $region20: #{tpu_custom_call.1} parent=1 // pred_region
      _
    $region21: #{tpu_custom_call.1} parent=1 // pred_fallthru
      _
    // Predicated region
    $region22: #{tpu_custom_call.1} parent=1 // pred_check
      _
    $region23: #{tpu_custom_call.1} parent=1 // pred_check_branch
      %51 = sbr.rel (0) target = $region25
    $region24: #{tpu_custom_call.1} parent=1 // pred_region
      %52 = dma.done [#allocation5], 256
    $region25: #{tpu_custom_call.1} parent=1 // pred_fallthru
      _
    // Predicated region
    $region26: #{tpu_custom_call.1} parent=1 // pred_check
      _
    $region27: #{tpu_custom_call.1} parent=1 // pred_check_branch
      %54 = sbr.rel (0) target = $region29
    $region28: #{tpu_custom_call.1} parent=1 // pred_region
      %55 = dma.done [#allocation7], 16
    $region29: #{tpu_custom_call.1} parent=1 // pred_fallthru
      _
    // Predicated region
    $region30: #{tpu_custom_call.1} parent=1 // pred_check
      _
    $region31: #{tpu_custom_call.1} parent=1 // pred_check_branch
      %57 = sbr.rel (0) target = $region33
    $region32: #{tpu_custom_call.1} parent=1 // pred_region
      %58 = dma.done [#allocation7], 16
    $region33: #{tpu_custom_call.1} parent=1 // pred_fallthru
      _
    %59 = sfence
    %s60 = sld [smem:[#allocation3]]
    %s61 = sld [smem:[#allocation3 + $0x1]]
    %s62 = sld [smem:[#allocation3 + $0x2]]
    %s63 = sld [smem:[#allocation3 + $0x80]]
    %s64 = sld [smem:[#allocation3 + $0x81]]
    %s65 = sld [smem:[#allocation3 + $0x82]]
    %s66 = sld [smem:[#allocation3 + $0x100]]
    %s67 = sld [smem:[#allocation3 + $0x101]]
    %s68 = sld [smem:[#allocation3 + $0x102]]
    %s69 = sld [smem:[#allocation3 + $0x180]]
    %s70 = sld [smem:[#allocation3 + $0x181]]
    %s71 = sld [smem:[#allocation3 + $0x182]]
    %s72 = sld [smem:[#allocation3 + $0x200]]
    %s73 = sld [smem:[#allocation3 + $0x201]]
    %s74 = sld [smem:[#allocation3 + $0x202]]
    %s75 = sld [smem:[#allocation3 + $0x280]]
    %s76 = sld [smem:[#allocation3 + $0x281]]
    %s77 = sld [smem:[#allocation3 + $0x282]]
    %s78 = sld [smem:[#allocation3 + $0x300]]
    %s79 = sld [smem:[#allocation3 + $0x301]]
    %s80 = sld [smem:[#allocation3 + $0x302]]
    %s81 = sld [smem:[#allocation3 + $0x380]]
    %s82 = sld [smem:[#allocation3 + $0x381]]
    %s83 = sld [smem:[#allocation3 + $0x382]]
    %s84 = sld [smem:[#allocation3 + $0x400]]
    %s85 = sld [smem:[#allocation3 + $0x401]]
    %s86 = sld [smem:[#allocation3 + $0x402]]
    %s87 = sld [smem:[#allocation3 + $0x480]]
    %s88 = sld [smem:[#allocation3 + $0x481]]
    %s89 = sld [smem:[#allocation3 + $0x482]]
    %s90 = sld [smem:[#allocation6]]
    %s91 = sld [smem:[#allocation6 + $0x1]]
    %s92 = sld [smem:[#allocation6 + $0x2]]
    %s93 = sld [smem:[#allocation6 + $0x3]]
    %s94 = sld [smem:[#allocation6 + $0x4]]
    %s95 = sld [smem:[#allocation6 + $0x5]]
    %s96 = sld [smem:[#allocation6 + $0x6]]
    %s97 = sld [smem:[#allocation6 + $0x7]]
    %s98 = sld [smem:[#allocation6 + $0x8]]
    %s99 = sld [smem:[#allocation6 + $0x9]]
    %s100 = sld [smem:[#allocation8]]
    %s101 = sld [smem:[#allocation8 + $0x1]]
    %s102 = sld [smem:[#allocation8 + $0x2]]
    %s103 = sld [smem:[#allocation8 + $0x3]]
    %s104 = sld [smem:[#allocation8 + $0x4]]
    %s105 = sld [smem:[#allocation8 + $0x5]]
    %s106 = sld [smem:[#allocation8 + $0x6]]
    %s107 = sld [smem:[#allocation8 + $0x7]]
    %s108 = sld [smem:[#allocation8 + $0x8]]
    %s109 = sld [smem:[#allocation8 + $0x9]]
    %s110 = sld [smem:[#allocation2]]
    %v111 = vld [vmem:[%s4] sm:$0xff]
    %s112 = scalar_lea.vmem %s4, 8
    %v113 = vld [vmem:[%s112] sm:$0xff]
    %s114 = scalar_lea.vmem %s4, 16
    %v115 = vld [vmem:[%s114] sm:$0xff]
    %v116 = vstv %s110
    %v117 = vstv %s60
    %v118 = vmul.f32 %v111, %v117
    %v119 = vstv %s90
    %v120 = vadd.f32 %v118, %v119
    %v121 = vstv %s61
    %v122 = vmul.f32 %v113, %v121
    %v123 = vadd.f32 %v120, %v122
    %v124 = vstv %s62
    %v125 = vmul.f32 %v115, %v124
    %v126 = vadd.f32 %v123, %v125
    %v127 = vmax.f32 %v126, 0.0
    %v128 = vstv %s100
    %v129 = vmul.f32 %v127, %v128
    %v130 = vadd.f32 %v116, %v129
    %v131 = vstv %s63
    %v132 = vmul.f32 %v111, %v131
    %v133 = vstv %s91
    %v134 = vadd.f32 %v132, %v133
    %v135 = vstv %s64
    %v136 = vmul.f32 %v113, %v135
    %v137 = vadd.f32 %v134, %v136
    %v138 = vstv %s65
    %v139 = vmul.f32 %v115, %v138
    %v140 = vadd.f32 %v137, %v139
    %v141 = vmax.f32 %v140, 0.0
    %v142 = vstv %s101
    %v143 = vmul.f32 %v141, %v142
    %v144 = vadd.f32 %v130, %v143
    %v145 = vstv %s66
    %v146 = vmul.f32 %v111, %v145
    %v147 = vstv %s92
    %v148 = vadd.f32 %v146, %v147
    %v149 = vstv %s67
    %v150 = vmul.f32 %v113, %v149
    %v151 = vadd.f32 %v148, %v150
    %v152 = vstv %s68
    %v153 = vmul.f32 %v115, %v152
    %v154 = vadd.f32 %v151, %v153
    %v155 = vmax.f32 %v154, 0.0
    %v156 = vstv %s102
    %v157 = vmul.f32 %v155, %v156
    %v158 = vadd.f32 %v144, %v157
    %v159 = vstv %s69
    %v160 = vmul.f32 %v111, %v159
    %v161 = vstv %s93
    %v162 = vadd.f32 %v160, %v161
    %v163 = vstv %s70
    %v164 = vmul.f32 %v113, %v163
    %v165 = vadd.f32 %v162, %v164
    %v166 = vstv %s71
    %v167 = vmul.f32 %v115, %v166
    %v168 = vadd.f32 %v165, %v167
    %v169 = vmax.f32 %v168, 0.0
    %v170 = vstv %s103
    %v171 = vmul.f32 %v169, %v170
    %v172 = vadd.f32 %v158, %v171
    %v173 = vstv %s72
    %v174 = vmul.f32 %v111, %v173
    %v175 = vstv %s94
    %v176 = vadd.f32 %v174, %v175
    %v177 = vstv %s73
    %v178 = vmul.f32 %v113, %v177
    %v179 = vadd.f32 %v176, %v178
    %v180 = vstv %s74
    %v181 = vmul.f32 %v115, %v180
    %v182 = vadd.f32 %v179, %v181
    %v183 = vmax.f32 %v182, 0.0
    %v184 = vstv %s104
    %v185 = vmul.f32 %v183, %v184
    %v186 = vadd.f32 %v172, %v185
    %v187 = vstv %s75
    %v188 = vmul.f32 %v111, %v187
    %v189 = vstv %s95
    %v190 = vadd.f32 %v188, %v189
    %v191 = vstv %s76
    %v192 = vmul.f32 %v113, %v191
    %v193 = vadd.f32 %v190, %v192
    %v194 = vstv %s77
    %v195 = vmul.f32 %v115, %v194
    %v196 = vadd.f32 %v193, %v195
    %v197 = vmax.f32 %v196, 0.0
    %v198 = vstv %s105
    %v199 = vmul.f32 %v197, %v198
    %v200 = vadd.f32 %v186, %v199
    %v201 = vstv %s78
    %v202 = vmul.f32 %v111, %v201
    %v203 = vstv %s96
    %v204 = vadd.f32 %v202, %v203
    %v205 = vstv %s79
    %v206 = vmul.f32 %v113, %v205
    %v207 = vadd.f32 %v204, %v206
    %v208 = vstv %s80
    %v209 = vmul.f32 %v115, %v208
    %v210 = vadd.f32 %v207, %v209
    %v211 = vmax.f32 %v210, 0.0
    %v212 = vstv %s106
    %v213 = vmul.f32 %v211, %v212
    %v214 = vadd.f32 %v200, %v213
    %v215 = vstv %s81
    %v216 = vmul.f32 %v111, %v215
    %v217 = vstv %s97
    %v218 = vadd.f32 %v216, %v217
    %v219 = vstv %s82
    %v220 = vmul.f32 %v113, %v219
    %v221 = vadd.f32 %v218, %v220
    %v222 = vstv %s83
    %v223 = vmul.f32 %v115, %v222
    %v224 = vadd.f32 %v221, %v223
    %v225 = vmax.f32 %v224, 0.0
    %v226 = vstv %s107
    %v227 = vmul.f32 %v225, %v226
    %v228 = vadd.f32 %v214, %v227
    %v229 = vstv %s84
    %v230 = vmul.f32 %v111, %v229
    %v231 = vstv %s98
    %v232 = vadd.f32 %v230, %v231
    %v233 = vstv %s85
    %v234 = vmul.f32 %v113, %v233
    %v235 = vadd.f32 %v232, %v234
    %v236 = vstv %s86
    %v237 = vmul.f32 %v115, %v236
    %v238 = vadd.f32 %v235, %v237
    %v239 = vmax.f32 %v238, 0.0
    %v240 = vstv %s108
    %v241 = vmul.f32 %v239, %v240
    %v242 = vadd.f32 %v228, %v241
    %v243 = vstv %s87
    %v244 = vmul.f32 %v111, %v243
    %v245 = vstv %s99
    %v246 = vadd.f32 %v244, %v245
    %v247 = vstv %s88
    %v248 = vmul.f32 %v113, %v247
    %v249 = vadd.f32 %v246, %v248
    %v250 = vstv %s89
    %v251 = vmul.f32 %v115, %v250
    %v252 = vadd.f32 %v249, %v251
    %v253 = vmax.f32 %v252, 0.0
    %v254 = vstv %s109
    %v255 = vmul.f32 %v253, %v254
    %v256 = vadd.f32 %v242, %v255
    %257 = vst [vmem:[#allocation9] sm:$0xff] %v256
    // Predicated region
    $region34: #{tpu_custom_call.1} parent=1 // pred_check
      _
    $region35: #{tpu_custom_call.1} parent=1 // pred_check_branch
      %259 = sbr.rel (0) target = $region37
    $region36: #{tpu_custom_call.1} parent=1 // pred_region
      %s261 = ssub.s32 128, 128
      %262 = vsyncadd [#allocation4], %s261
      %s264 = sshll.u32 [#allocation9], 4
      %s265 = int_to_ptr.vmem [resolvable:$true] %s264
      %267 = dma.vmem_to_hbm [thread:$0]  %s265, 128, %s5, [#allocation4]
    $region37: #{tpu_custom_call.1} parent=1 // pred_fallthru
      _
    // Predicated region
    $region38: #{tpu_custom_call.1} parent=1 // pred_check
      _
    $region39: #{tpu_custom_call.1} parent=1 // pred_check_branch
      %269 = sbr.rel (0) target = $region41
    $region40: #{tpu_custom_call.1} parent=1 // pred_region
      %270 = dma.done [#allocation4], 128
    $region41: #{tpu_custom_call.1} parent=1 // pred_fallthru
      _
    %271 = vsyncpa [#allocation4], 1
    %272 = vsyncpa [#allocation5], 1
    %273 = vsyncpa [#allocation7], 1

</llo_original>
